<compile_context>
chip_gen: v7x
topology: tpu7x:2x2x1
jax: 0.10.0
libtpu: 0.0.40
codegen_flags: <defaults>
</compile_context>

<pallas_src>
import functools

import jax
import jax.numpy as jnp
from jax.experimental import pallas as pl
from jax.experimental.pallas import tpu as pltpu

_LANE = 128
_SUBLANE = 8


def _round_up(x, m):
    return ((x + m - 1) // m) * m


def _cdiv(a, b):
    return (a + b - 1) // b


def _vmem_capacity_bytes():
    try:
        return int(pltpu.get_tpu_info().vmem_capacity_bytes)
    except Exception:
        return 64 << 20  # conservative (v7x per-core VMEM)


def _use_bf16_exp():
    """bf16 EUP exists on v6e / v7x; not on v5e and older."""
    try:
        kind = jax.devices()[0].device_kind.lower()
    except Exception:
        return False
    return ("v6" in kind) or ("v7" in kind)


def _choose_tm(rows, resident_bytes, per_row_bytes, vmem_cap, row_tile=None):
    """Largest 8/128-aligned row tile that fits the VMEM budget, capped so the
    grid has at least 2 steps (dual-TC sharding on v7x)."""
    rows_pad = _round_up(max(int(rows), 1), _SUBLANE)
    if row_tile is not None:
        tm = _round_up(int(row_tile), _SUBLANE)
    else:
        if vmem_cap <= (64 << 20):
            budget = vmem_cap - (24 << 20)        # extra headroom on 64 MiB parts
        else:
            budget = min(vmem_cap - (16 << 20), 112 << 20)
        budget = max(budget, 16 << 20)
        tm = _SUBLANE
        for cand in (1024, 768, 512, 384, 256, 128, 64, 32, 16, 8):
            if resident_bytes + cand * per_row_bytes <= budget:
                tm = cand
                break
        # TODO(synk): if even tm=8 overflows the budget (huge class counts),
        # additionally tile the class dimension N.
        if rows_pad > _SUBLANE:
            align = _LANE if rows_pad >= 2 * _LANE else _SUBLANE
            tm = min(tm, _round_up(_cdiv(rows_pad, 2), align))
    return max(_SUBLANE, min(tm, rows_pad))


def _vmem_limit(needed_bytes, vmem_cap):
    headroom = (12 << 20) if vmem_cap <= (64 << 20) else (8 << 20)
    return int(min(max(needed_bytes + (8 << 20), 32 << 20), vmem_cap - headroom))


def _resident_spec(shape):
    """Constant-index resident block; single-buffered where supported."""
    idx = lambda i: (0,) * len(shape)
    try:
        return pl.BlockSpec(shape, idx, pipeline_mode=pl.Buffered(1))
    except Exception:  # pipeline_mode / Buffered unavailable -> default 2-buf
        return pl.BlockSpec(shape, idx)


# ----------------------------------------------------------------------------
# Kernels
# ----------------------------------------------------------------------------
def _softmax_rows(logits, exp_dtype):
    m = jnp.max(logits, axis=-1, keepdims=True)
    e = jnp.exp((logits - m).astype(exp_dtype)).astype(jnp.float32)
    denom = jnp.sum(e, axis=-1, keepdims=True)
    return e * pl.reciprocal(denom, approx=True)


def _linear_kernel(x_ref, w_ref, b_ref, o_ref, *, n_out, apply_softmax,
                   exp_dtype):
    # x_ref: (tm, K) f32; w_ref: (K, Npad) bf16 resident; b_ref: (1, Npad) f32
    xb = x_ref[...].astype(w_ref.dtype)                 # in-kernel f32->bf16 cast
    logits = jnp.dot(xb, w_ref[...], preferred_element_type=jnp.float32)
    logits = (logits + b_ref[...])[:, :n_out]           # drop padded classes
    if apply_softmax:
        logits = _softmax_rows(logits, exp_dtype)
    o_ref[...] = logits.astype(o_ref.dtype)


def _fused_mid_kernel(x_ref, w1_ref, b1_ref, w2_ref, b2_ref, *out_refs,
                      n_mid, n_out, apply_softmax, exp_dtype, write_feats):
    # Two chained linears; the hidden activation never leaves VMEM/registers.
    if write_feats:
        feat_ref, o_ref = out_refs
    else:
        (o_ref,) = out_refs
    xb = x_ref[...].astype(w1_ref.dtype)
    h = jnp.dot(xb, w1_ref[...], preferred_element_type=jnp.float32)
    h = h + b1_ref[...]
    if write_feats:
        feat_ref[...] = h[:, :n_mid].astype(feat_ref.dtype)
    logits = jnp.dot(h.astype(w2_ref.dtype), w2_ref[...],
                     preferred_element_type=jnp.float32)
    logits = (logits + b2_ref[...])[:, :n_out]
    if apply_softmax:
        logits = _softmax_rows(logits, exp_dtype)
    o_ref[...] = logits.astype(o_ref.dtype)


# ----------------------------------------------------------------------------
# pallas_call wrappers
# ----------------------------------------------------------------------------
def _linear_pallas(x2d, w_t, b_row, *, n_out, apply_softmax, exp_dtype,
                   out_dtype, row_tile=None):
    rows, K = x2d.shape
    Kw, Npad = w_t.shape
    assert K == Kw
    x_b = jnp.dtype(x2d.dtype).itemsize
    w_b = jnp.dtype(w_t.dtype).itemsize
    o_b = jnp.dtype(out_dtype).itemsize
    vmem_cap = _vmem_capacity_bytes()
    resident = K * Npad * w_b + Npad * 4                     # single-buffered
    per_row = 2 * K * x_b + Npad * 4 + 2 * n_out * o_b       # x(2buf)+tmp+out(2buf)
    tm = _choose_tm(rows, resident, per_row, vmem_cap, row_tile)
    needed = resident + tm * per_row

    kernel = functools.partial(_linear_kernel, n_out=n_out,
                               apply_softmax=apply_softmax, exp_dtype=exp_dtype)
    return pl.pallas_call(
        kernel,
        out_shape=jax.ShapeDtypeStruct((rows, n_out), out_dtype),
        grid_spec=pltpu.PrefetchScalarGridSpec(
            num_scalar_prefetch=0,
            grid=(_cdiv(rows, tm),),
            in_specs=[
                pl.BlockSpec((tm, K), lambda i: (i, 0)),   # activation tile (f32)
                _resident_spec((K, Npad)),                 # resident weight (bf16)
                _resident_spec((1, Npad)),                 # resident bias (f32)
            ],
            out_specs=pl.BlockSpec((tm, n_out), lambda i: (i, 0)),
        ),
        compiler_params=pltpu.CompilerParams(
            dimension_semantics=("parallel",),
            vmem_limit_bytes=_vmem_limit(needed, vmem_cap),
        ),
    )(x2d, w_t, b_row)


def _fused_mid_pallas(x2d, w1_t, b1_row, w2_t, b2_row, *, n_mid, n_out,
                      apply_softmax, write_feats, exp_dtype, out_dtype,
                      row_tile=None):
    rows, K = x2d.shape
    Kw, Mpad = w1_t.shape
    Mpad2, Npad = w2_t.shape
    assert K == Kw and Mpad == Mpad2
    x_b = jnp.dtype(x2d.dtype).itemsize
    w_b = jnp.dtype(w1_t.dtype).itemsize
    o_b = jnp.dtype(out_dtype).itemsize
    vmem_cap = _vmem_capacity_bytes()
    resident = K * Mpad * w_b + Mpad * 4 + Mpad * Npad * w_b + Npad * 4
    per_row = 2 * K * x_b + Mpad * 4 + Npad * 4 + 2 * n_out * o_b
    if write_feats:
        per_row += 2 * n_mid * o_b
    tm = _choose_tm(rows, resident, per_row, vmem_cap, row_tile)
    needed = resident + tm * per_row

    kernel = functools.partial(_fused_mid_kernel, n_mid=n_mid, n_out=n_out,
                               apply_softmax=apply_softmax, exp_dtype=exp_dtype,
                               write_feats=write_feats)
    if write_feats:
        out_shape = (jax.ShapeDtypeStruct((rows, n_mid), out_dtype),
                     jax.ShapeDtypeStruct((rows, n_out), out_dtype))
        out_specs = (pl.BlockSpec((tm, n_mid), lambda i: (i, 0)),
                     pl.BlockSpec((tm, n_out), lambda i: (i, 0)))
    else:
        out_shape = jax.ShapeDtypeStruct((rows, n_out), out_dtype)
        out_specs = pl.BlockSpec((tm, n_out), lambda i: (i, 0))

    return pl.pallas_call(
        kernel,
        out_shape=out_shape,
        grid_spec=pltpu.PrefetchScalarGridSpec(
            num_scalar_prefetch=0,
            grid=(_cdiv(rows, tm),),
            in_specs=[
                pl.BlockSpec((tm, K), lambda i: (i, 0)),
                _resident_spec((K, Mpad)),
                _resident_spec((1, Mpad)),
                _resident_spec((Mpad, Npad)),
                _resident_spec((1, Npad)),
            ],
            out_specs=out_specs,
        ),
        compiler_params=pltpu.CompilerParams(
            dimension_semantics=("parallel",),
            vmem_limit_bytes=_vmem_limit(needed, vmem_cap),
        ),
    )(x2d, w1_t, b1_row, w2_t, b2_row)


# ----------------------------------------------------------------------------
# jitted forward functions
# ----------------------------------------------------------------------------
@functools.partial(jax.jit,
                   static_argnames=("n_out", "apply_softmax", "exp_dtype",
                                    "out_dtype", "row_tile"))
def _ctc_single_forward(x, w_t, b, *, n_out, apply_softmax, exp_dtype,
                        out_dtype, row_tile=None):
    B, T, C = x.shape
    x2d = x.reshape(B * T, C)                      # no dtype cast here
    out = _linear_pallas(x2d, w_t, b, n_out=n_out, apply_softmax=apply_softmax,
                         exp_dtype=exp_dtype, out_dtype=out_dtype,
                         row_tile=row_tile)
    return out.reshape(B, T, n_out)


@functools.partial(jax.jit,
                   static_argnames=("n_mid", "n_out", "apply_softmax",
                                    "return_feats", "exp_dtype", "out_dtype",
                                    "row_tile"))
def _ctc_mid_forward(x, w1_t, b1, w2_t, b2, *, n_mid, n_out, apply_softmax,
                     return_feats, exp_dtype, out_dtype, row_tile=None):
    B, T, C = x.shape
    x2d = x.reshape(B * T, C)
    if return_feats:
        feats, out = _fused_mid_pallas(
            x2d, w1_t, b1, w2_t, b2, n_mid=n_mid, n_out=n_out,
            apply_softmax=apply_softmax, write_feats=True,
            exp_dtype=exp_dtype, out_dtype=out_dtype, row_tile=row_tile)
        return feats.reshape(B, T, n_mid), out.reshape(B, T, n_out)
    out = _fused_mid_pallas(
        x2d, w1_t, b1, w2_t, b2, n_mid=n_mid, n_out=n_out,
        apply_softmax=apply_softmax, write_feats=False,
        exp_dtype=exp_dtype, out_dtype=out_dtype, row_tile=row_tile)
    return out.reshape(B, T, n_out)


# ----------------------------------------------------------------------------
# Module
# ----------------------------------------------------------------------------
class CTCHeadPallas:
    """JAX/Pallas port of the PyTorch CTCHead forward pass."""

    def __init__(self, in_channels, out_channels, fc_decay=0.0004,
                 mid_channels=None, return_feats=False,
                 compute_dtype=jnp.bfloat16, out_dtype=jnp.bfloat16,
                 row_tile=None, key=None):
        # fc_decay is an L2-regularization hyperparameter (training-time only);
        # it does not change the forward computation.
        self.in_channels = in_channels
        self.out_channels = out_channels
        self.mid_channels = mid_channels
        self.return_feats = return_feats
        self.out_dtype = out_dtype
        self.row_tile = row_tile
        self.exp_dtype = jnp.bfloat16 if _use_bf16_exp() else jnp.float32
        if key is None:
            key = jax.random.PRNGKey(0)

        def init_linear(k, fan_in, fan_out):
            kw, kb = jax.random.split(k)
            bound = 1.0 / float(fan_in) ** 0.5
            w = jax.random.uniform(kw, (fan_out, fan_in), jnp.float32,
                                   -bound, bound)
            b = jax.random.uniform(kb, (fan_out,), jnp.float32, -bound, bound)
            return w, b

        # Weights are pre-transposed to (C_in, N) and the class/hidden dims are
        # padded to a multiple of 128 (lane-dense MXU output); padded columns
        # are zero and are sliced off inside the kernel before softmax/store.
        # TODO(synk): also pad the contraction dims (in_channels/mid_channels)
        # to a multiple of 128 with in-kernel zero-fill of the extra x columns
        # for full MXU cadence on ragged-K heads.
        n_pad = _round_up(out_channels, _LANE)
        if mid_channels is None:
            w, b = init_linear(key, in_channels, out_channels)
            w_t = jnp.zeros((in_channels, n_pad), jnp.float32)
            self.fc_w_t = w_t.at[:, :out_channels].set(w.T).astype(compute_dtype)
            self.fc_b = (jnp.zeros((1, n_pad), jnp.float32)
                         .at[0, :out_channels].set(b))
        else:
            m_pad = _round_up(mid_channels, _LANE)
            k1, k2 = jax.random.split(key)
            w1, b1 = init_linear(k1, in_channels, mid_channels)
            w2, b2 = init_linear(k2, mid_channels, out_channels)
            w1_t = jnp.zeros((in_channels, m_pad), jnp.float32)
            self.fc1_w_t = (w1_t.at[:, :mid_channels].set(w1.T)
                            .astype(compute_dtype))
            self.fc1_b = (jnp.zeros((1, m_pad), jnp.float32)
                          .at[0, :mid_channels].set(b1))
            w2_t = jnp.zeros((m_pad, n_pad), jnp.float32)
            self.fc2_w_t = (w2_t.at[:mid_channels, :out_channels].set(w2.T)
                            .astype(compute_dtype))
            self.fc2_b = (jnp.zeros((1, n_pad), jnp.float32)
                          .at[0, :out_channels].set(b2))

    def __call__(self, x, training=False):
        apply_softmax = not training
        need_feats = training and self.return_feats
        if self.mid_channels is None:
            predicts = _ctc_single_forward(
                x, self.fc_w_t, self.fc_b, n_out=self.out_channels,
                apply_softmax=apply_softmax, exp_dtype=self.exp_dtype,
                out_dtype=self.out_dtype, row_tile=self.row_tile)
            feats = x
        elif need_feats:
            feats, predicts = _ctc_mid_forward(
                x, self.fc1_w_t, self.fc1_b, self.fc2_w_t, self.fc2_b,
                n_mid=self.mid_channels, n_out=self.out_channels,
                apply_softmax=apply_softmax, return_feats=True,
                exp_dtype=self.exp_dtype, out_dtype=self.out_dtype,
                row_tile=self.row_tile)
        else:
            predicts = _ctc_mid_forward(
                x, self.fc1_w_t, self.fc1_b, self.fc2_w_t, self.fc2_b,
                n_mid=self.mid_channels, n_out=self.out_channels,
                apply_softmax=apply_softmax, return_feats=False,
                exp_dtype=self.exp_dtype, out_dtype=self.out_dtype,
                row_tile=self.row_tile)
            feats = None

        if not training:
            # eval mode: result is softmax(predicts, dim=2) (applied in-kernel),
            # regardless of return_feats — matches the PyTorch forward.
            return predicts
        if self.return_feats:
            return feats, predicts
        return predicts


if __name__ == "__main__":
    B, T, C_IN, C_OUT, C_MID = 2, 8, 32, 77, 48
    key = jax.random.PRNGKey(0)
    kx, kp1, kp2 = jax.random.split(key, 3)
    x = jax.random.normal(kx, (B, T, C_IN), dtype=jnp.float32)
    x2d_bf16 = x.reshape(B * T, C_IN).astype(jnp.bfloat16)

    # ---- single-linear path, eval mode: softmax(fc(x), dim=2)
    head = CTCHeadPallas(in_channels=C_IN, out_channels=C_OUT, key=kp1)
    out = jax.block_until_ready(head(x, training=False))
    assert out.shape == (B, T, C_OUT)
    logits = jnp.dot(x2d_bf16, head.fc_w_t,
                     preferred_element_type=jnp.float32) + head.fc_b
    ref = jax.nn.softmax(logits[:, :C_OUT], axis=-1).reshape(B, T, C_OUT)
    assert jnp.allclose(out.astype(jnp.float32), ref, atol=2e-2, rtol=2e-2)
    assert jnp.allclose(jnp.sum(out.astype(jnp.float32), axis=2), 1.0, atol=2e-2)

    # ---- single-linear path, training mode: raw logits
    out_tr = jax.block_until_ready(head(x, training=True))
    assert out_tr.shape == (B, T, C_OUT)
    assert jnp.allclose(out_tr.astype(jnp.float32),
                        logits[:, :C_OUT].reshape(B, T, C_OUT),
                        atol=5e-2, rtol=5e-2)

    # ---- mid_channels path (fused two-layer kernel), eval mode
    head2 = CTCHeadPallas(in_channels=C_IN, out_channels=C_OUT,
                          mid_channels=C_MID, return_feats=True, key=kp2)
    out2 = jax.block_until_ready(head2(x, training=False))
    assert out2.shape == (B, T, C_OUT)
    h_ref = jnp.dot(x2d_bf16, head2.fc1_w_t,
                    preferred_element_type=jnp.float32) + head2.fc1_b
    logits2 = jnp.dot(h_ref.astype(jnp.bfloat16), head2.fc2_w_t,
                      preferred_element_type=jnp.float32) + head2.fc2_b
    ref2 = jax.nn.softmax(logits2[:, :C_OUT], axis=-1).reshape(B, T, C_OUT)
    assert jnp.allclose(out2.astype(jnp.float32), ref2, atol=2e-2, rtol=2e-2)
    assert jnp.allclose(jnp.sum(out2.astype(jnp.float32), axis=2), 1.0, atol=2e-2)

    # ---- mid_channels path, training mode with return_feats=True
    feats_tr, pred_tr = head2(x, training=True)
    jax.block_until_ready(pred_tr)
    assert feats_tr.shape == (B, T, C_MID) and pred_tr.shape == (B, T, C_OUT)
    assert jnp.allclose(feats_tr.astype(jnp.float32).reshape(B * T, C_MID),
                        h_ref[:, :C_MID], atol=5e-2, rtol=5e-2)
    assert jnp.allclose(pred_tr.astype(jnp.float32).reshape(B * T, C_OUT),
                        logits2[:, :C_OUT], atol=5e-2, rtol=5e-2)

    # ---- mid_channels path, training mode with return_feats=False
    head3 = CTCHeadPallas(in_channels=C_IN, out_channels=C_OUT,
                          mid_channels=C_MID, return_feats=False, key=kp2)
    pred3 = jax.block_until_ready(head3(x, training=True))
    assert pred3.shape == (B, T, C_OUT)

    # ---- ragged row count (rows not a multiple of the tile) on single path
    xr = jax.random.normal(kx, (3, 5, C_IN), dtype=jnp.float32)
    outr = jax.block_until_ready(head(xr, training=False))
    assert outr.shape == (3, 5, C_OUT)
    assert jnp.allclose(jnp.sum(outr.astype(jnp.float32), axis=2), 1.0, atol=2e-2)

    print("KERNEL_OK")
</pallas_src>

<mosaic_0001>
module attributes {stable_mosaic.version = 11 : i64} {
  func.func @_linear_kernel(%arg0: i32, %arg1: memref<8x32xf32, #tpu.memory_space<vmem>>, %arg2: memref<32x128xbf16, #tpu.memory_space<vmem>>, %arg3: memref<1x128xf32, #tpu.memory_space<vmem>>, %arg4: memref<8x77xbf16, #tpu.memory_space<vmem>>) attributes {dimension_semantics = [#tpu.dimension_semantics<parallel>], iteration_bounds = array<i64: 2>, scalar_prefetch = 0 : i64, scratch_operands = 0 : i64, tpu.core_type = #tpu.core_type<tc>, window_params = [{transform_indices = @transform_0, window_bounds = array<i64: 8, 32>}, {pipeline_mode = #tpu.pipeline_mode<synchronous>, transform_indices = @transform_1, window_bounds = array<i64: 32, 128>}, {pipeline_mode = #tpu.pipeline_mode<synchronous>, transform_indices = @transform_2, window_bounds = array<i64: 1, 128>}, {transform_indices = @transform_3, window_bounds = array<i64: 8, 77>}]} {
    %c0 = arith.constant 0 : index
    %c0_0 = arith.constant 0 : index
    %0 = vector.load %arg1[%c0, %c0_0] : memref<8x32xf32, #tpu.memory_space<vmem>>, vector<8x32xf32>
    %1 = arith.truncf %0 : vector<8x32xf32> to vector<8x32xbf16>
    %c0_1 = arith.constant 0 : index
    %c0_2 = arith.constant 0 : index
    %2 = vector.load %arg2[%c0_1, %c0_2] : memref<32x128xbf16, #tpu.memory_space<vmem>>, vector<32x128xbf16>
    %cst = arith.constant dense<0.000000e+00> : vector<8x128xf32>
    %3 = tpu.matmul %1, %2, %cst {dimension_numbers = #tpu.dot_dimension_numbers<[1], [0], [0], [1], [0, 0, 1, 1], [], []>} : vector<8x32xbf16>, vector<32x128xbf16>, vector<8x128xf32> -> vector<8x128xf32>
    %c0_3 = arith.constant 0 : index
    %c0_4 = arith.constant 0 : index
    %4 = vector.load %arg3[%c0_3, %c0_4] : memref<1x128xf32, #tpu.memory_space<vmem>>, vector<1x128xf32>
    %5 = vector.broadcast %4 : vector<1x128xf32> to vector<8x128xf32>
    %6 = arith.addf %3, %5 : vector<8x128xf32>
    %7 = vector.extract_strided_slice %6 {offsets = [0, 0], sizes = [8, 77], strides = [1, 1]} : vector<8x128xf32> to vector<8x77xf32>
    %cst_5 = arith.constant dense<0xFF800000> : vector<8xf32>
    %8 = vector.multi_reduction <maximumf>, %7, %cst_5 [1] : vector<8x77xf32> to vector<8xf32>
    %9 = vector.shape_cast %8 : vector<8xf32> to vector<8x1xf32>
    %10 = vector.broadcast %9 : vector<8x1xf32> to vector<8x77xf32>
    %11 = arith.subf %7, %10 : vector<8x77xf32>
    %12 = math.exp %11 : vector<8x77xf32>
    %cst_6 = arith.constant dense<0.000000e+00> : vector<8xf32>
    %13 = vector.multi_reduction <add>, %12, %cst_6 [1] : vector<8x77xf32> to vector<8xf32>
    %14 = vector.shape_cast %13 : vector<8xf32> to vector<8x1xf32>
    %15 = tpu.reciprocal %14 {approx = true} : vector<8x1xf32> -> vector<8x1xf32>
    %16 = vector.broadcast %15 : vector<8x1xf32> to vector<8x77xf32>
    %17 = arith.mulf %12, %16 : vector<8x77xf32>
    %18 = arith.truncf %17 : vector<8x77xf32> to vector<8x77xbf16>
    %c0_7 = arith.constant 0 : index
    %c0_8 = arith.constant 0 : index
    %19 = vector.load %arg4[%c0_7, %c0_8] : memref<8x77xbf16, #tpu.memory_space<vmem>>, vector<8x77xbf16>
    tpu.vector_store %arg4[%c0_7, %c0_8], %18 {strides = array<i32>} : memref<8x77xbf16, #tpu.memory_space<vmem>>, vector<8x77xbf16>,
    return
  }
  func.func @transform_0(%arg0: i32) -> (i32, i32) {
    %c0_i32 = arith.constant 0 : i32
    %c0_i32_0 = arith.constant 0 : i32
    return %arg0, %c0_i32 : i32, i32
  }
  func.func @transform_1(%arg0: i32) -> (i32, i32) {
    %c0_i32 = arith.constant 0 : i32
    %c0_i32_0 = arith.constant 0 : i32
    %c0_i32_1 = arith.constant 0 : i32
    return %c0_i32, %c0_i32_0 : i32, i32
  }
  func.func @transform_2(%arg0: i32) -> (i32, i32) {
    %c0_i32 = arith.constant 0 : i32
    %c0_i32_0 = arith.constant 0 : i32
    %c0_i32_1 = arith.constant 0 : i32
    return %c0_i32, %c0_i32_0 : i32, i32
  }
  func.func @transform_3(%arg0: i32) -> (i32, i32) {
    %c0_i32 = arith.constant 0 : i32
    %c0_i32_0 = arith.constant 0 : i32
    return %arg0, %c0_i32 : i32, i32
  }
}

</mosaic_0001>

<llo_original>
// kernel: _ctc_single_forward.1
$region0: #{_ctc_single_forward.1}
  #allocation0 [shape = 'u32[]', space=smem, size = 0x4, offset = 0x4, fixed_abs, tag = 'smem constant byte address 0x4 - core index']
  #allocation1 [shape = 'u32[144,128]{1,0:T(1,128)}', space=vmem, size = 0x12000, scoped, tag = 'internal scratch']
  %s0 = inlined_call_operand.hbm [shape: f32[16,32], index: 0, kind: input, shape index: {}]
  %s1 = inlined_call_operand.hbm [shape: bf16[32,128], index: 1, kind: input, shape index: {}]
  %s2 = inlined_call_operand.vmem [shape: f32[1,128], index: 2, kind: input, shape index: {}]
  %s3 = inlined_call_operand.hbm [shape: bf16[16,77], index: 3, kind: output, shape index: {}]
  %s4 = sld [smem:[#allocation0]]
  $region53: #{_ctc_single_forward.1} parent=0
    _
  %s6 = ssub.s32 1, %s4
  %s7 = scalar_select 0, %s6, %s4
  $region1: #{_ctc_single_forward.1} parent=0
    #allocation2 [shape = 'u8[8192]{0}', space=vmem, size = 0x2000, scoped, tag = 'input window, operand 0']
    #allocation3 [shape = 's32[2]{0}', space=sflag, size = 0x8, scoped, tag = 'scoped memory for _ctc_single_forward.1']
    #allocation4 [shape = 's32[2]{0}', space=sflag, size = 0x8, scoped, tag = 'scoped memory for _ctc_single_forward.1']
    #allocation5 [shape = 'u8[8192]{0}', space=vmem, size = 0x2000, scoped, tag = 'input window, operand 1, single buffered']
    #allocation6 [shape = 's32[1]{0}', space=sflag, size = 0x4, scoped, tag = 'scoped memory for _ctc_single_forward.1']
    #allocation7 [shape = 'u8[4096]{0}', space=vmem, size = 0x1000, scoped, tag = 'output window, operand 0']
    %8 = vsyncpa [#allocation3], 0
    %s9 = scalar_lea.sflag [#allocation3], 1
    %10 = vsyncpa %s9, 0
    %11 = vsyncpa [#allocation6], 0
    %12 = vsyncpa [#allocation4], 0
    %s13 = scalar_lea.sflag [#allocation4], 1
    %14 = vsyncpa %s13, 0
    loop: start=0, step=1, limit=4
    $region2: #{_ctc_single_forward.1} parent=1 // loop_pre_header
      _
    $region3: #{_ctc_single_forward.1} parent=1 // loop_header
      %s16 = sphi 0, %s20
      %p17 = scmp.ge.s32.totalorder %s16, 4
      %s26 = sphi 0, %s28
      %s29 = sphi 0, %s26
      %s30 = sphi 0, %s29
      %s46 = sphi 0, %s30
      %s50 = sphi 0, %s50
      %s52 = sphi 0, %s50
      %s53 = sphi 0, %s52
      %s67 = sphi 0, %s53
      %s71 = sphi 0, %s71
      %s73 = sphi 0, %s71
      %s74 = sphi 0, %s73
      %s88 = sphi 0, %s74
      %s94 = sphi 0, %s96
      %s97 = sphi 0, %s94
      %s98 = sphi 0, %s97
      %s114 = sphi 0, %s98
    $region4: #{_ctc_single_forward.1} parent=1 // loop_header_branch
      %19 = sbr.rel (%p17) target = $region8
    $region5: #{_ctc_single_forward.1} parent=1 // loop_body
      %s21 = ssub.s32 %s16, 1
      %s22 = ssub.s32 %s16, 2
      %s23 = sadd.s32 %s16, 1
      %s24 = ssub.s32 %s16, %s23
      %p25 = scmp.eq.s32.totalorder %s24, 0
      %s27 = sadd.s32 %s26, 1
      %s28 = scalar_select %p25, %s26, %s27
      %p31 = pneg %p25
      %p32 = scmp.eq.s32.totalorder %s16, 1
      %p33 = por %p31, %p32
      %p34 = scmp.ne.s32.totalorder %s26, %s29
      %p35 = scmp.eq.s32.totalorder %s16, 0
      %p36 = por %p34, %p35
      %p37 = scmp.ne.s32.totalorder %s26, %s29
      %p38 = scmp.eq.s32.totalorder %s21, 1
      %p39 = por %p37, %p38
      %p40 = scmp.ne.s32.totalorder %s29, %s30
      %p41 = scmp.eq.s32.totalorder %s21, 0
      %p42 = por %p40, %p41
      %p43 = scmp.ne.s32.totalorder %s29, %s30
      %p44 = scmp.eq.s32.totalorder %s22, 1
      %p45 = por %p43, %p44
      %p47 = scmp.ne.s32.totalorder %s30, %s46
      %p48 = scmp.eq.s32.totalorder %s22, 0
      %p49 = por %p47, %p48
      %s51 = sadd.s32 %s50, 1
      %p54 = scmp.eq.s32.totalorder %s16, 1
      %p55 = scmp.ne.s32.totalorder %s50, %s52
      %p56 = scmp.eq.s32.totalorder %s16, 0
      %p57 = por %p55, %p56
      %p58 = scmp.ne.s32.totalorder %s50, %s52
      %p59 = scmp.eq.s32.totalorder %s21, 1
      %p60 = por %p58, %p59
      %p61 = scmp.ne.s32.totalorder %s52, %s53
      %p62 = scmp.eq.s32.totalorder %s21, 0
      %p63 = por %p61, %p62
      %p64 = scmp.ne.s32.totalorder %s52, %s53
      %p65 = scmp.eq.s32.totalorder %s22, 1
      %p66 = por %p64, %p65
      %p68 = scmp.ne.s32.totalorder %s53, %s67
      %p69 = scmp.eq.s32.totalorder %s22, 0
      %p70 = por %p68, %p69
      %s72 = sadd.s32 %s71, 1
      %p75 = scmp.eq.s32.totalorder %s16, 1
      %p76 = scmp.ne.s32.totalorder %s71, %s73
      %p77 = scmp.eq.s32.totalorder %s16, 0
      %p78 = por %p76, %p77
      %p79 = scmp.ne.s32.totalorder %s71, %s73
      %p80 = scmp.eq.s32.totalorder %s21, 1
      %p81 = por %p79, %p80
      %p82 = scmp.ne.s32.totalorder %s73, %s74
      %p83 = scmp.eq.s32.totalorder %s21, 0
      %p84 = por %p82, %p83
      %p85 = scmp.ne.s32.totalorder %s73, %s74
      %p86 = scmp.eq.s32.totalorder %s22, 1
      %p87 = por %p85, %p86
      %p89 = scmp.ne.s32.totalorder %s74, %s88
      %p90 = scmp.eq.s32.totalorder %s22, 0
      %p91 = por %p89, %p90
      %s92 = ssub.s32 %s16, %s23
      %p93 = scmp.eq.s32.totalorder %s92, 0
      %s95 = sadd.s32 %s94, 1
      %s96 = scalar_select %p93, %s94, %s95
      %p99 = pneg %p93
      %p100 = scmp.eq.s32.totalorder %s16, 1
      %p101 = por %p99, %p100
      %p102 = scmp.ne.s32.totalorder %s94, %s97
      %p103 = scmp.eq.s32.totalorder %s16, 0
      %p104 = por %p102, %p103
      %p105 = scmp.ne.s32.totalorder %s94, %s97
      %p106 = scmp.eq.s32.totalorder %s21, 1
      %p107 = por %p105, %p106
      %p108 = scmp.ne.s32.totalorder %s97, %s98
      %p109 = scmp.eq.s32.totalorder %s21, 0
      %p110 = por %p108, %p109
      %p111 = scmp.ne.s32.totalorder %s97, %s98
      %p112 = scmp.eq.s32.totalorder %s22, 1
      %p113 = por %p111, %p112
      %p115 = scmp.ne.s32.totalorder %s98, %s114
      %p116 = scmp.eq.s32.totalorder %s22, 0
      %p117 = por %p115, %p116
      %p118 = scmp.le.s32.totalorder 1, %s16
      %p119 = scmp.lt.s32.totalorder %s16, 3
      %p120 = pnand %p118, %p119
      %p121 = pneg %p120
      // Predicated region
      $region9: #{_ctc_single_forward.1} parent=5 // pred_check
        _
      $region10: #{_ctc_single_forward.1} parent=5 // pred_check_branch
        %123 = sbr.rel (%p120) target = $region12
      $region11: #{_ctc_single_forward.1} parent=5 // pred_region
        %s124 = ssub.s32 %s16, 1
        // Predicated region
        $region13: #{_ctc_single_forward.1} parent=11 // pred_check
          %p125 = pneg %p63
        $region14: #{_ctc_single_forward.1} parent=11 // pred_check_branch
          %127 = sbr.rel (%p125) target = $region16
        $region15: #{_ctc_single_forward.1} parent=11 // pred_region
          %s129 = ssub.s32 256, 256
          %130 = vsyncadd [#allocation6], %s129
          %s131 = sshll.u32 [#allocation5], 4
          %s132 = int_to_ptr.vmem [resolvable:$true] %s131
          %137 = dma.hbm_to_vmem [thread:$0]  %s1, 256, %s132, [#allocation6], 64, 64, 4
        $region16: #{_ctc_single_forward.1} parent=11 // pred_fallthru
          _
        // Predicated region
        $region17: #{_ctc_single_forward.1} parent=11 // pred_check
          %p138 = pneg %p84
        $region18: #{_ctc_single_forward.1} parent=11 // pred_check_branch
          %140 = sbr.rel (%p138) target = $region20
        $region19: #{_ctc_single_forward.1} parent=11 // pred_region
          _
        $region20: #{_ctc_single_forward.1} parent=11 // pred_fallthru
          _
      $region12: #{_ctc_single_forward.1} parent=5 // pred_fallthru
        _
      %p141 = scmp.lt.s32.totalorder %s16, 2
      // Predicated region
      $region21: #{_ctc_single_forward.1} parent=5 // pred_check
        %p142 = pneg %p141
      $region22: #{_ctc_single_forward.1} parent=5 // pred_check_branch
        %144 = sbr.rel (%p142) target = $region24
      $region23: #{_ctc_single_forward.1} parent=5 // pred_region
        // Predicated region
        $region25: #{_ctc_single_forward.1} parent=23 // pred_check
          %p145 = pneg %p36
        $region26: #{_ctc_single_forward.1} parent=23 // pred_check_branch
          %147 = sbr.rel (%p145) target = $region28
        $region27: #{_ctc_single_forward.1} parent=23 // pred_region
          %s148 = sand.u32 %s26, 1
          %s149 = scalar_lea.sflag [#allocation3], %s148
          %s150 = sand.u32 %s26, 1
          %s151 = smul.addr %s150, 8
          %s152 = scalar_lea.vmem [#allocation2], %s151
          %s154 = ssub.s32 128, 128
          %155 = vsyncadd %s149, %s154
          %s156 = smul.addr %s16, 128
          %s157 = scalar_lea.hbm %s0, %s156
          %s159 = sshll.u32 %s152, 4
          %s160 = int_to_ptr.vmem [resolvable:$true] %s159
          %162 = dma.hbm_to_vmem [thread:$0]  %s157, 128, %s160, %s149
        $region28: #{_ctc_single_forward.1} parent=23 // pred_fallthru
          _
      $region24: #{_ctc_single_forward.1} parent=5 // pred_fallthru
        _
      %p163 = scmp.le.s32.totalorder 1, %s16
      %p164 = scmp.lt.s32.totalorder %s16, 3
      %p165 = pnand %p163, %p164
      %p166 = pneg %p165
      // Predicated region
      $region29: #{_ctc_single_forward.1} parent=5 // pred_check
        _
      $region30: #{_ctc_single_forward.1} parent=5 // pred_check_branch
        %168 = sbr.rel (%p165) target = $region32
      $region31: #{_ctc_single_forward.1} parent=5 // pred_region
        %s169 = ssub.s32 %s16, 1
        %s170 = sand.u32 %s29, 1
        %s171 = scalar_lea.sflag [#allocation3], %s170
        %s172 = sand.u32 %s29, 1
        %s173 = smul.addr %s172, 8
        %s174 = scalar_lea.vmem [#allocation2], %s173
        // Predicated region
        $region33: #{_ctc_single_forward.1} parent=31 // pred_check
          %p175 = pneg %p42
        $region34: #{_ctc_single_forward.1} parent=31 // pred_check_branch
          %177 = sbr.rel (%p175) target = $region36
        $region35: #{_ctc_single_forward.1} parent=31 // pred_region
          %178 = dma.done %s171, 128
        $region36: #{_ctc_single_forward.1} parent=31 // pred_fallthru
          _
        // Predicated region
        $region37: #{_ctc_single_forward.1} parent=31 // pred_check
          %p179 = pneg %p63
        $region38: #{_ctc_single_forward.1} parent=31 // pred_check_branch
          %181 = sbr.rel (%p179) target = $region40
        $region39: #{_ctc_single_forward.1} parent=31 // pred_region
          %182 = dma.done [#allocation6], 256
        $region40: #{_ctc_single_forward.1} parent=31 // pred_fallthru
          _
        %s183 = sand.u32 %s29, 1
        %s184 = scalar_lea.sflag [#allocation3], %s183
        %s185 = sand.u32 %s29, 1
        %s186 = smul.addr %s185, 8
        %s187 = scalar_lea.vmem [#allocation2], %s186
        %p188 = pneg %p42
        %p189 = pneg %p39
        %p190 = pneg %p63
        %p191 = pneg %p60
        %p192 = pneg %p84
        %p193 = pneg %p81
        %p194 = pneg %p110
        %p195 = pneg %p107
        %s196 = sand.u32 %s97, 1
        %s197 = scalar_lea.sflag [#allocation4], %s196
        %s198 = sand.u32 %s97, 1
        %s199 = smul.addr %s198, 4
        %s200 = scalar_lea.vmem [#allocation7], %s199
        %v202 = vld [vmem:[%s174] sm:$0xff]
        %v203 = vpack.c.bf16 %v202, %v202
        %v204 = vld [vmem:[#allocation5] sm:$0xf]
        %v205 = vld [vmem:[#allocation5 + $0x4] sm:$0xf]
        %v206 = vld [vmem:[#allocation5 + $0x8] sm:$0xf]
        %v207 = vld [vmem:[#allocation5 + $0xc] sm:$0xf]
        %v208 = vld [vmem:[%s2] sm:$0x1]
        %v210 = vlaneseq
        %v211 = vshrl.u32 %v210, 7
        %v212 = vsub.s32 0, %v211
        %v213 = vrot.slane %v208, %v212
        %v219 = vunpack.c.l.b16 %v204
        %v220 = vunpack.c.l.b16 %v205
        %v221 = vunpack.c.l.b16 %v206
        %v222 = vunpack.c.l.b16 %v207
        %v223 = vpack.c.b16 %v220, %v219
        %v224 = vpack.c.b16 %v222, %v221
        %vm227 = vcmask 261120
        %v229 = vsel %vm227, %v203, 0
        %231 = vmatprep.subr.bf16.mxu0 0
        %232 = vmatpush1.bf16.msra.mxu0 %v223
        %233 = vmatprep.subr.bf16.mxu0 0
        %234 = vmatpush1.bf16.msra.mxu0 %v224
        %235 = vmatprep.subr.bf16.mxu0 0
        %236 = vmatpush1.bf16.msra.mxu0 0
        %237 = vmatprep.subr.bf16.mxu0 0
        %238 = vmatpush1.bf16.msra.mxu0 0
        %239 = vmatprep.subr.bf16.mxu0 0
        %240 = vmatpush1.bf16.msra.mxu0 0
        %241 = vmatprep.subr.bf16.mxu0 0
        %242 = vmatpush1.bf16.msra.mxu0 0
        %243 = vmatprep.subr.bf16.mxu0 0
        %244 = vmatpush1.bf16.msra.mxu0 0
        %245 = vmatprep.subr.bf16.mxu0 0
        %246 = vmatpush1.bf16.msra.mxu0 0
        %247 = vmatprep.subr.bf16.mxu0 0
        %248 = vmatpush1.bf16.msra.mxu0 0
        %249 = vmatprep.subr.bf16.mxu0 0
        %250 = vmatpush1.bf16.msra.mxu0 0
        %251 = vmatprep.subr.bf16.mxu0 0
        %252 = vmatpush1.bf16.msra.mxu0 0
        %253 = vmatprep.subr.bf16.mxu0 0
        %254 = vmatpush1.bf16.msra.mxu0 0
        %255 = vmatprep.subr.bf16.mxu0 0
        %256 = vmatpush1.bf16.msra.mxu0 0
        %257 = vmatprep.subr.bf16.mxu0 0
        %258 = vmatpush1.bf16.msra.mxu0 0
        %259 = vmatprep.subr.bf16.mxu0 0
        %260 = vmatpush1.bf16.msra.mxu0 0
        %261 = vmatprep.subr.bf16.mxu0 0
        %262 = vmatpush1.bf16.msra.mxu0 0
        %263 = vmatprep.mubr.bf16.mxu0 0
        %264 = vmatmul.mubr.bf16.gmra.mrb[0].mxu0 %v229
        %v265 = vpop.f32.mrb[0].mxu0
        %v266 = vadd.f32 %v213, %v265
        %v267 = vpop.f32.mrb[0].mxu0
        %v268 = vpop.f32.mrb[0].mxu0
        %v269 = vpop.f32.mrb[0].mxu0
        %270 = vdwg.mxu0
        %vm271 = vcmask 629760
        %v272 = vsel %vm271, %v266, -inf
        %273 = vmax.xlane.f32.xlu0 %v272
        %v274 = vpop.xlane.xlu0 %273
        %v275 = vsub.f32 %v266, %v274
        %v276 = vmul.f32 %v275, 1.442695
        %v277 = vpow.pop %v276
        %v278 = vsel %vm271, %v277, 0.0
        %279 = vadd.xlane.f32.xlu0 %v278
        %v280 = vpop.xlane.xlu0 %279
        %v281 = vrcp.pop %v280
        %v282 = vmul.f32 %v277, %v281
        %v283 = vpack.c.bf16 %v282, %v282
        %vm284 = vcmask 625664
        %285 = vst.msk [vmem:[%s200] sm:$0xf] %vm284, %v283
        %s286 = sand.u32 %s97, 1
        %s287 = scalar_lea.sflag [#allocation4], %s286
        %s288 = sand.u32 %s97, 1
        %s289 = smul.addr %s288, 4
        %s290 = scalar_lea.vmem [#allocation7], %s289
        // Predicated region
        $region41: #{_ctc_single_forward.1} parent=31 // pred_check
          %p291 = pneg %p107
        $region42: #{_ctc_single_forward.1} parent=31 // pred_check_branch
          %293 = sbr.rel (%p291) target = $region44
        $region43: #{_ctc_single_forward.1} parent=31 // pred_region
          %s295 = ssub.s32 64, 64
          %296 = vsyncadd %s287, %s295
          %s297 = smul.addr %s21, 64
          %s298 = scalar_lea.hbm %s3, %s297
          %s300 = sshll.u32 %s290, 4
          %s301 = int_to_ptr.vmem [resolvable:$true] %s300
          %303 = dma.vmem_to_hbm [thread:$0]  %s301, 64, %s298, %s287
        $region44: #{_ctc_single_forward.1} parent=31 // pred_fallthru
          _
      $region32: #{_ctc_single_forward.1} parent=5 // pred_fallthru
        _
      %p304 = scmp.le.s32.totalorder 2, %s16
      // Predicated region
      $region45: #{_ctc_single_forward.1} parent=5 // pred_check
        %p305 = pneg %p304
      $region46: #{_ctc_single_forward.1} parent=5 // pred_check_branch
        %307 = sbr.rel (%p305) target = $region48
      $region47: #{_ctc_single_forward.1} parent=5 // pred_region
        %s308 = ssub.s32 %s16, 2
        // Predicated region
        $region49: #{_ctc_single_forward.1} parent=47 // pred_check
          %p309 = pneg %p113
        $region50: #{_ctc_single_forward.1} parent=47 // pred_check_branch
          %311 = sbr.rel (%p309) target = $region52
        $region51: #{_ctc_single_forward.1} parent=47 // pred_region
          %s312 = sand.u32 %s98, 1
          %s313 = scalar_lea.sflag [#allocation4], %s312
          %s314 = sand.u32 %s98, 1
          %s315 = smul.addr %s314, 4
          %s316 = scalar_lea.vmem [#allocation7], %s315
          %317 = dma.done %s313, 64
        $region52: #{_ctc_single_forward.1} parent=47 // pred_fallthru
          _
      $region48: #{_ctc_single_forward.1} parent=5 // pred_fallthru
        _
    $region6: #{_ctc_single_forward.1} parent=1 // loop_footer
      %s20 = sadd.s32 1, %s16
    $region7: #{_ctc_single_forward.1} parent=1 // loop_footer_branch
      %15 = sbr.rel target = $region3
    $region8: #{_ctc_single_forward.1} parent=1 // loop_exit
      _
    %318 = vsyncpa [#allocation3], 1
    %s319 = scalar_lea.sflag [#allocation3], 1
    %320 = vsyncpa %s319, 1
    %321 = vsyncpa [#allocation6], 1
    %322 = vsyncpa [#allocation4], 1
    %s323 = scalar_lea.sflag [#allocation4], 1
    %324 = vsyncpa %s323, 1

</llo_original>
